<compile_context>
chip_gen: v7x
topology: tpu7x:2x2x1
jax: 0.10.0
libtpu: 0.0.40
codegen_flags: <defaults>
</compile_context>

<pallas_src>
import jax
import jax.numpy as jnp
from jax.experimental import pallas as pl
from jax.experimental.pallas import tpu as pltpu


# ----------------------------------------------------------------------------
# Kernels
# ----------------------------------------------------------------------------
def _digitnn_kernel_eval(x_ref, w1_ref, b1_ref, w2_ref, b2_ref, o_ref):
    # layer1: x @ W1 + b1, ReLU  (accumulate in f32 regardless of input dtype)
    h = jnp.dot(x_ref[...], w1_ref[...], preferred_element_type=jnp.float32)
    h = jnp.maximum(h + b1_ref[...], 0.0)                 # (TB,H) + (1,H)
    # layer2: h @ W2 + b2   (cast h to the weight dtype only for the MXU feed)
    out = jnp.dot(h.astype(w2_ref.dtype), w2_ref[...],
                  preferred_element_type=jnp.float32)
    o_ref[...] = (out + b2_ref[...]).astype(o_ref.dtype)  # lane-dense store


def _digitnn_kernel_train(x_ref, mask_ref, w1_ref, b1_ref, w2_ref, b2_ref,
                          o_ref):
    h = jnp.dot(x_ref[...], w1_ref[...], preferred_element_type=jnp.float32)
    h = jnp.maximum(h + b1_ref[...], 0.0)
    # Inverted dropout: mask entries are 0 or 1/(1-p), precomputed per row.
    h = h * mask_ref[...]                                  # f32 VPU multiply
    out = jnp.dot(h.astype(w2_ref.dtype), w2_ref[...],
                  preferred_element_type=jnp.float32)
    o_ref[...] = (out + b2_ref[...]).astype(o_ref.dtype)


# ----------------------------------------------------------------------------
# Wrapper
# ----------------------------------------------------------------------------
def _round_up(n, m):
    return (n + m - 1) // m * m


def make_dropout_mask(key, batch, hidden, p=0.3):
    """Inverted-dropout mask with values in {0, 1/(1-p)} (nn.Dropout semantics)."""
    keep = jax.random.bernoulli(key, 1.0 - p, (batch, hidden))
    return keep.astype(jnp.float32) * (1.0 / (1.0 - p))


def digitnn_forward(x, w1, b1, w2, b2, *, dropout_mask=None, use_bf16=False,
                    tile_b=1024):
    """Forward pass of DigitNN.

    x:  (B, input_dim) float32
    w1: (input_dim, num_hidden)   (transposed vs. PyTorch's (out, in))
    b1: (num_hidden,)
    w2: (num_hidden, output_dim)
    b2: (output_dim,)
    dropout_mask: None (eval mode) or (B, num_hidden) inverted-dropout mask.
    use_bf16: feed the two matmuls with bf16 operands (f32 accumulation).
    """
    B, in_dim = x.shape
    H = w1.shape[1]
    out_dim = w2.shape[1]

    # ---- pad output to a lane-dense multiple of 128 (unmasked vector stores)
    out_pad = _round_up(max(out_dim, 128), 128)
    w2p = jnp.pad(w2, ((0, 0), (0, out_pad - out_dim)))
    b2p = jnp.pad(b2, ((0, out_pad - out_dim),))

    # ---- batch tiling: TB rows per grid step, batch padded to a multiple ----
    TB = tile_b if B >= tile_b else max(8, _round_up(B, 8))
    B_pad = _round_up(B, TB)
    if B_pad != B:
        x = jnp.pad(x, ((0, B_pad - B), (0, 0)))
        if dropout_mask is not None:
            dropout_mask = jnp.pad(dropout_mask, ((0, B_pad - B), (0, 0)))

    mm_dtype = jnp.bfloat16 if use_bf16 else jnp.float32
    xk = x.astype(mm_dtype)
    w1k = w1.astype(mm_dtype)
    w2k = w2p.astype(mm_dtype)
    b1_row = b1.reshape(1, H).astype(jnp.float32)
    b2_row = b2p.reshape(1, out_pad).astype(jnp.float32)

    grid = (B_pad // TB,)
    # x / mask / out are tiled over the batch; weights & biases are pinned
    # resident in VMEM (constant index_map) for the whole grid.
    x_spec = pl.BlockSpec((TB, in_dim), lambda i: (i, 0))
    w1_spec = pl.BlockSpec((in_dim, H), lambda i: (0, 0))
    b1_spec = pl.BlockSpec((1, H), lambda i: (0, 0))
    w2_spec = pl.BlockSpec((H, out_pad), lambda i: (0, 0))
    b2_spec = pl.BlockSpec((1, out_pad), lambda i: (0, 0))
    out_spec = pl.BlockSpec((TB, out_pad), lambda i: (i, 0))

    compiler_params = pltpu.CompilerParams(
        dimension_semantics=("parallel",),          # megacore / v7x 2-TC
        vmem_limit_bytes=32 * 1024 * 1024,          # safe on v5e/v6e/v7x
    )

    if dropout_mask is None:
        kernel = _digitnn_kernel_eval
        in_specs = [x_spec, w1_spec, b1_spec, w2_spec, b2_spec]
        args = (xk, w1k, b1_row, w2k, b2_row)
    else:
        kernel = _digitnn_kernel_train
        m_spec = pl.BlockSpec((TB, H), lambda i: (i, 0))
        in_specs = [x_spec, m_spec, w1_spec, b1_spec, w2_spec, b2_spec]
        args = (xk, dropout_mask.astype(jnp.float32), w1k, b1_row, w2k, b2_row)

    out = pl.pallas_call(
        kernel,
        out_shape=jax.ShapeDtypeStruct((B_pad, out_pad), jnp.float32),
        grid=grid,
        in_specs=in_specs,
        out_specs=out_spec,
        compiler_params=compiler_params,
    )(*args)
    return out[:B, :out_dim]


# ----------------------------------------------------------------------------
# Deterministic init mimicking nn.Linear's uniform(-1/sqrt(in), 1/sqrt(in))
# ----------------------------------------------------------------------------
def _init_linear(key, in_features, out_features):
    kw, kb = jax.random.split(key)
    bound = 1.0 / jnp.sqrt(jnp.float32(in_features))
    # Stored directly in (in, out) layout for the kernel.
    w = jax.random.uniform(kw, (in_features, out_features), jnp.float32,
                           minval=-bound, maxval=bound)
    b = jax.random.uniform(kb, (out_features,), jnp.float32,
                           minval=-bound, maxval=bound)
    return w, b


if __name__ == "__main__":
    # DigitNN(input_dim, num_hidden, output_dim) at small shapes.
    batch, input_dim, num_hidden, output_dim = 8, 64, 32, 10

    key = jax.random.PRNGKey(0)
    kx, k1, k2, kd, kx2 = jax.random.split(key, 5)

    x = jax.random.normal(kx, (batch, input_dim), jnp.float32)
    w1, b1 = _init_linear(k1, input_dim, num_hidden)
    w2, b2 = _init_linear(k2, num_hidden, output_dim)

    # ---- eval mode (dropout = identity), f32 path, tight tolerance ----------
    out_eval = jax.block_until_ready(digitnn_forward(x, w1, b1, w2, b2))
    ref_eval = jnp.maximum(x @ w1 + b1, 0.0) @ w2 + b2
    assert out_eval.shape == (batch, output_dim)
    assert jnp.allclose(out_eval, ref_eval, atol=1e-5, rtol=1e-5)

    # ---- training mode (dropout active), same mask used for the reference ---
    mask = make_dropout_mask(kd, batch, num_hidden, p=0.3)
    out_train = jax.block_until_ready(
        digitnn_forward(x, w1, b1, w2, b2, dropout_mask=mask))
    ref_train = (jnp.maximum(x @ w1 + b1, 0.0) * mask) @ w2 + b2
    assert out_train.shape == (batch, output_dim)
    assert jnp.allclose(out_train, ref_train, atol=1e-5, rtol=1e-5)

    # ---- multi-tile grid path (batch not a multiple of the tile) ------------
    xb = jax.random.normal(kx2, (300, input_dim), jnp.float32)
    out_big = jax.block_until_ready(
        digitnn_forward(xb, w1, b1, w2, b2, tile_b=128))
    ref_big = jnp.maximum(xb @ w1 + b1, 0.0) @ w2 + b2
    assert out_big.shape == (300, output_dim)
    assert jnp.allclose(out_big, ref_big, atol=1e-5, rtol=1e-5)

    # ---- bf16 matmul-operand path (v6e/v7x roofline lever), loose tolerance -
    out_bf16 = jax.block_until_ready(
        digitnn_forward(x, w1, b1, w2, b2, use_bf16=True))
    assert out_bf16.shape == (batch, output_dim)
    assert jnp.allclose(out_bf16, ref_eval, atol=1e-1, rtol=1e-1)

    print("KERNEL_OK")
</pallas_src>

<mosaic_0001>
module attributes {stable_mosaic.version = 11 : i64} {
  func.func @_digitnn_kernel_eval(%arg0: i32, %arg1: memref<8x64xf32, #tpu.memory_space<vmem>>, %arg2: memref<64x32xf32, #tpu.memory_space<vmem>>, %arg3: memref<1x32xf32, #tpu.memory_space<vmem>>, %arg4: memref<32x128xf32, #tpu.memory_space<vmem>>, %arg5: memref<1x128xf32, #tpu.memory_space<vmem>>, %arg6: memref<8x128xf32, #tpu.memory_space<vmem>>) attributes {dimension_semantics = [#tpu.dimension_semantics<parallel>], iteration_bounds = array<i64: 1>, scalar_prefetch = 0 : i64, scratch_operands = 0 : i64, tpu.core_type = #tpu.core_type<tc>, window_params = [{transform_indices = @transform_0, window_bounds = array<i64: 8, 64>}, {pipeline_mode = #tpu.pipeline_mode<synchronous>, transform_indices = @transform_1, window_bounds = array<i64: 64, 32>}, {pipeline_mode = #tpu.pipeline_mode<synchronous>, transform_indices = @transform_2, window_bounds = array<i64: 1, 32>}, {pipeline_mode = #tpu.pipeline_mode<synchronous>, transform_indices = @transform_3, window_bounds = array<i64: 32, 128>}, {pipeline_mode = #tpu.pipeline_mode<synchronous>, transform_indices = @transform_4, window_bounds = array<i64: 1, 128>}, {transform_indices = @transform_5, window_bounds = array<i64: 8, 128>}]} {
    %c0 = arith.constant 0 : index
    %c0_0 = arith.constant 0 : index
    %0 = vector.load %arg1[%c0, %c0_0] : memref<8x64xf32, #tpu.memory_space<vmem>>, vector<8x64xf32>
    %c0_1 = arith.constant 0 : index
    %c0_2 = arith.constant 0 : index
    %1 = vector.load %arg2[%c0_1, %c0_2] : memref<64x32xf32, #tpu.memory_space<vmem>>, vector<64x32xf32>
    %cst = arith.constant dense<0.000000e+00> : vector<8x32xf32>
    %2 = tpu.matmul %0, %1, %cst {dimension_numbers = #tpu.dot_dimension_numbers<[1], [0], [0], [1], [0, 0, 1, 1], [], []>} : vector<8x64xf32>, vector<64x32xf32>, vector<8x32xf32> -> vector<8x32xf32>
    %c0_3 = arith.constant 0 : index
    %c0_4 = arith.constant 0 : index
    %3 = vector.load %arg3[%c0_3, %c0_4] : memref<1x32xf32, #tpu.memory_space<vmem>>, vector<1x32xf32>
    %4 = vector.broadcast %3 : vector<1x32xf32> to vector<8x32xf32>
    %5 = arith.addf %2, %4 : vector<8x32xf32>
    %cst_5 = arith.constant 0.000000e+00 : f32
    %6 = vector.broadcast %cst_5 : f32 to vector<8x32xf32>
    %7 = arith.maximumf %5, %6 : vector<8x32xf32>
    %c0_6 = arith.constant 0 : index
    %c0_7 = arith.constant 0 : index
    %8 = vector.load %arg4[%c0_6, %c0_7] : memref<32x128xf32, #tpu.memory_space<vmem>>, vector<32x128xf32>
    %cst_8 = arith.constant dense<0.000000e+00> : vector<8x128xf32>
    %9 = tpu.matmul %7, %8, %cst_8 {dimension_numbers = #tpu.dot_dimension_numbers<[1], [0], [0], [1], [0, 0, 1, 1], [], []>} : vector<8x32xf32>, vector<32x128xf32>, vector<8x128xf32> -> vector<8x128xf32>
    %c0_9 = arith.constant 0 : index
    %c0_10 = arith.constant 0 : index
    %10 = vector.load %arg5[%c0_9, %c0_10] : memref<1x128xf32, #tpu.memory_space<vmem>>, vector<1x128xf32>
    %11 = vector.broadcast %10 : vector<1x128xf32> to vector<8x128xf32>
    %12 = arith.addf %9, %11 : vector<8x128xf32>
    %c0_11 = arith.constant 0 : index
    %c0_12 = arith.constant 0 : index
    %13 = vector.load %arg6[%c0_11, %c0_12] : memref<8x128xf32, #tpu.memory_space<vmem>>, vector<8x128xf32>
    tpu.vector_store %arg6[%c0_11, %c0_12], %12 {strides = array<i32>} : memref<8x128xf32, #tpu.memory_space<vmem>>, vector<8x128xf32>,
    return
  }
  func.func @transform_0(%arg0: i32) -> (i32, i32) {
    %c0_i32 = arith.constant 0 : i32
    %c0_i32_0 = arith.constant 0 : i32
    return %arg0, %c0_i32 : i32, i32
  }
  func.func @transform_1(%arg0: i32) -> (i32, i32) {
    %c0_i32 = arith.constant 0 : i32
    %c0_i32_0 = arith.constant 0 : i32
    %c0_i32_1 = arith.constant 0 : i32
    return %c0_i32, %c0_i32_0 : i32, i32
  }
  func.func @transform_2(%arg0: i32) -> (i32, i32) {
    %c0_i32 = arith.constant 0 : i32
    %c0_i32_0 = arith.constant 0 : i32
    %c0_i32_1 = arith.constant 0 : i32
    return %c0_i32, %c0_i32_0 : i32, i32
  }
  func.func @transform_3(%arg0: i32) -> (i32, i32) {
    %c0_i32 = arith.constant 0 : i32
    %c0_i32_0 = arith.constant 0 : i32
    %c0_i32_1 = arith.constant 0 : i32
    return %c0_i32, %c0_i32_0 : i32, i32
  }
  func.func @transform_4(%arg0: i32) -> (i32, i32) {
    %c0_i32 = arith.constant 0 : i32
    %c0_i32_0 = arith.constant 0 : i32
    %c0_i32_1 = arith.constant 0 : i32
    return %c0_i32, %c0_i32_0 : i32, i32
  }
  func.func @transform_5(%arg0: i32) -> (i32, i32) {
    %c0_i32 = arith.constant 0 : i32
    %c0_i32_0 = arith.constant 0 : i32
    return %arg0, %c0_i32 : i32, i32
  }
}

</mosaic_0001>

<llo_original>
// kernel: tpu_custom_call.1
$region0: #{tpu_custom_call.1}
  #allocation0 [shape = 'u32[]', space=smem, size = 0x4, offset = 0x4, fixed_abs, tag = 'smem constant byte address 0x4 - core index']
  #allocation1 [shape = 'u32[144,128]{1,0:T(1,128)}', space=vmem, size = 0x12000, scoped, tag = 'internal scratch']
  %s0 = inlined_call_operand.vmem [shape: f32[8,64], index: 0, kind: input, shape index: {}]
  %s1 = inlined_call_operand.vmem [shape: f32[64,32], index: 1, kind: input, shape index: {}]
  %s2 = inlined_call_operand.vmem [shape: f32[1,32], index: 2, kind: input, shape index: {}]
  %s3 = inlined_call_operand.vmem [shape: f32[32,128], index: 3, kind: input, shape index: {}]
  %s4 = inlined_call_operand.vmem [shape: f32[1,128], index: 4, kind: input, shape index: {}]
  %s5 = inlined_call_operand.hbm [shape: f32[8,128], index: 5, kind: output, shape index: {}]
  %s6 = sld [smem:[#allocation0]]
  $region30: #{tpu_custom_call.1} parent=0
    _
  %s8 = ssub.s32 1, %s6
  %s9 = scalar_select 0, %s8, %s6
  $region1: #{tpu_custom_call.1} parent=0
    #allocation2 [shape = 'u8[4096]{0}', space=vmem, size = 0x1000, scoped, tag = 'output window, operand 0, single buffered']
    #allocation3 [shape = 's32[1]{0}', space=sflag, size = 0x4, scoped, tag = 'scoped memory for tpu_custom_call.1']
    %10 = vsyncpa [#allocation3], 0
    // Predicated region
    $region2: #{tpu_custom_call.1} parent=1 // pred_check
      _
    $region3: #{tpu_custom_call.1} parent=1 // pred_check_branch
      %12 = sbr.rel (0) target = $region5
    $region4: #{tpu_custom_call.1} parent=1 // pred_region
      _
    $region5: #{tpu_custom_call.1} parent=1 // pred_fallthru
      _
    // Predicated region
    $region6: #{tpu_custom_call.1} parent=1 // pred_check
      _
    $region7: #{tpu_custom_call.1} parent=1 // pred_check_branch
      %14 = sbr.rel (0) target = $region9
    $region8: #{tpu_custom_call.1} parent=1 // pred_region
      _
    $region9: #{tpu_custom_call.1} parent=1 // pred_fallthru
      _
    // Predicated region
    $region10: #{tpu_custom_call.1} parent=1 // pred_check
      _
    $region11: #{tpu_custom_call.1} parent=1 // pred_check_branch
      %16 = sbr.rel (0) target = $region13
    $region12: #{tpu_custom_call.1} parent=1 // pred_region
      _
    $region13: #{tpu_custom_call.1} parent=1 // pred_fallthru
      _
    // Predicated region
    $region14: #{tpu_custom_call.1} parent=1 // pred_check
      _
    $region15: #{tpu_custom_call.1} parent=1 // pred_check_branch
      %18 = sbr.rel (0) target = $region17
    $region16: #{tpu_custom_call.1} parent=1 // pred_region
      _
    $region17: #{tpu_custom_call.1} parent=1 // pred_fallthru
      _
    // Predicated region
    $region18: #{tpu_custom_call.1} parent=1 // pred_check
      _
    $region19: #{tpu_custom_call.1} parent=1 // pred_check_branch
      %20 = sbr.rel (0) target = $region21
    $region20: #{tpu_custom_call.1} parent=1 // pred_region
      _
    $region21: #{tpu_custom_call.1} parent=1 // pred_fallthru
      _
    %v21 = vld [vmem:[%s0] sm:$0xff]
    %v22 = vld [vmem:[%s1] sm:$0xff]
    %v23 = vld [vmem:[%s1 + $0x8] sm:$0xff]
    %v24 = vld [vmem:[%s1 + $0x10] sm:$0xff]
    %v25 = vld [vmem:[%s1 + $0x18] sm:$0xff]
    %v26 = vld [vmem:[%s1 + $0x20] sm:$0xff]
    %v27 = vld [vmem:[%s1 + $0x28] sm:$0xff]
    %v28 = vld [vmem:[%s1 + $0x30] sm:$0xff]
    %v29 = vld [vmem:[%s1 + $0x38] sm:$0xff]
    %v30 = vld [vmem:[%s2] sm:$0x1]
    %v32 = vlaneseq
    %v33 = vshrl.u32 %v32, 7
    %v34 = vsub.s32 0, %v33
    %v35 = vrot.slane %v30, %v34
    %vm37 = vcmask 523264
    %v39 = vsel %vm37, %v21, 0
    %41 = vmatprep.subr.mxu0 0.0
    %42 = vmatpush1.msra.mxu0 %v22
    %43 = vmatprep.subr.mxu0 0.0
    %44 = vmatpush1.msra.mxu0 %v23
    %45 = vmatprep.subr.mxu0 0.0
    %46 = vmatpush1.msra.mxu0 %v24
    %47 = vmatprep.subr.mxu0 0.0
    %48 = vmatpush1.msra.mxu0 %v25
    %49 = vmatprep.subr.mxu0 0.0
    %50 = vmatpush1.msra.mxu0 %v26
    %51 = vmatprep.subr.mxu0 0.0
    %52 = vmatpush1.msra.mxu0 %v27
    %53 = vmatprep.subr.mxu0 0.0
    %54 = vmatpush1.msra.mxu0 %v28
    %55 = vmatprep.subr.mxu0 0.0
    %56 = vmatpush1.msra.mxu0 %v29
    %57 = vmatprep.subr.mxu0 0.0
    %58 = vmatpush1.msra.mxu0 0.0
    %59 = vmatprep.subr.mxu0 0.0
    %60 = vmatpush1.msra.mxu0 0.0
    %61 = vmatprep.subr.mxu0 0.0
    %62 = vmatpush1.msra.mxu0 0.0
    %63 = vmatprep.subr.mxu0 0.0
    %64 = vmatpush1.msra.mxu0 0.0
    %65 = vmatprep.subr.mxu0 0.0
    %66 = vmatpush1.msra.mxu0 0.0
    %67 = vmatprep.subr.mxu0 0.0
    %68 = vmatpush1.msra.mxu0 0.0
    %69 = vmatprep.subr.mxu0 0.0
    %70 = vmatpush1.msra.mxu0 0.0
    %71 = vmatprep.subr.mxu0 0.0
    %72 = vmatpush1.msra.mxu0 0.0
    %73 = vmatprep.subr.mxu0 0.0
    %74 = vmatpush1.msra.mxu0 0.0
    %75 = vmatprep.subr.mxu0 0.0
    %76 = vmatpush1.msra.mxu0 0.0
    %77 = vmatprep.subr.mxu0 0.0
    %78 = vmatpush1.msra.mxu0 0.0
    %79 = vmatprep.subr.mxu0 0.0
    %80 = vmatpush1.msra.mxu0 0.0
    %81 = vmatprep.subr.mxu0 0.0
    %82 = vmatpush1.msra.mxu0 0.0
    %83 = vmatprep.subr.mxu0 0.0
    %84 = vmatpush1.msra.mxu0 0.0
    %85 = vmatprep.subr.mxu0 0.0
    %86 = vmatpush1.msra.mxu0 0.0
    %87 = vmatprep.subr.mxu0 0.0
    %88 = vmatpush1.msra.mxu0 0.0
    %89 = vmatprep.subr.mxu0 0.0
    %90 = vmatpush1.msra.mxu0 0.0
    %91 = vmatprep.subr.mxu0 0.0
    %92 = vmatpush1.msra.mxu0 0.0
    %93 = vmatprep.subr.mxu0 0.0
    %94 = vmatpush1.msra.mxu0 0.0
    %95 = vmatprep.subr.mxu0 0.0
    %96 = vmatpush1.msra.mxu0 0.0
    %97 = vmatprep.subr.mxu0 0.0
    %98 = vmatpush1.msra.mxu0 0.0
    %99 = vmatprep.subr.mxu0 0.0
    %100 = vmatpush1.msra.mxu0 0.0
    %101 = vmatprep.subr.mxu0 0.0
    %102 = vmatpush1.msra.mxu0 0.0
    %103 = vmatprep.subr.mxu0 0.0
    %104 = vmatpush1.msra.mxu0 0.0
    %105 = vmatprep.mubr.f32.mxu0 0.0
    %106 = vmatmul.mubr.f32.gmra.mrb[0].mxu0 %v39
    %v107 = vpop.f32.mrb[0].mxu0
    %v108 = vadd.f32 %v35, %v107
    %v109 = vpop.f32.mrb[0].mxu0
    %110 = vdwg.mxu0
    %v111 = vmax.f32 %v108, 0.0
    %v112 = vld [vmem:[%s3] sm:$0xff]
    %v113 = vld [vmem:[%s3 + $0x8] sm:$0xff]
    %v114 = vld [vmem:[%s3 + $0x10] sm:$0xff]
    %v115 = vld [vmem:[%s3 + $0x18] sm:$0xff]
    %v116 = vld [vmem:[%s4] sm:$0x1]
    %v118 = vlaneseq
    %v119 = vshrl.u32 %v118, 7
    %v120 = vsub.s32 0, %v119
    %v121 = vrot.slane %v116, %v120
    %vm123 = vcmask 261120
    %v125 = vsel %vm123, %v111, 0
    %127 = vmatprep.subr.mxu0 0.0
    %128 = vmatpush1.msra.mxu0 %v112
    %129 = vmatprep.subr.mxu0 0.0
    %130 = vmatpush1.msra.mxu0 %v113
    %131 = vmatprep.subr.mxu0 0.0
    %132 = vmatpush1.msra.mxu0 %v114
    %133 = vmatprep.subr.mxu0 0.0
    %134 = vmatpush1.msra.mxu0 %v115
    %135 = vmatprep.subr.mxu0 0.0
    %136 = vmatpush1.msra.mxu0 0.0
    %137 = vmatprep.subr.mxu0 0.0
    %138 = vmatpush1.msra.mxu0 0.0
    %139 = vmatprep.subr.mxu0 0.0
    %140 = vmatpush1.msra.mxu0 0.0
    %141 = vmatprep.subr.mxu0 0.0
    %142 = vmatpush1.msra.mxu0 0.0
    %143 = vmatprep.subr.mxu0 0.0
    %144 = vmatpush1.msra.mxu0 0.0
    %145 = vmatprep.subr.mxu0 0.0
    %146 = vmatpush1.msra.mxu0 0.0
    %147 = vmatprep.subr.mxu0 0.0
    %148 = vmatpush1.msra.mxu0 0.0
    %149 = vmatprep.subr.mxu0 0.0
    %150 = vmatpush1.msra.mxu0 0.0
    %151 = vmatprep.subr.mxu0 0.0
    %152 = vmatpush1.msra.mxu0 0.0
    %153 = vmatprep.subr.mxu0 0.0
    %154 = vmatpush1.msra.mxu0 0.0
    %155 = vmatprep.subr.mxu0 0.0
    %156 = vmatpush1.msra.mxu0 0.0
    %157 = vmatprep.subr.mxu0 0.0
    %158 = vmatpush1.msra.mxu0 0.0
    %159 = vmatprep.subr.mxu0 0.0
    %160 = vmatpush1.msra.mxu0 0.0
    %161 = vmatprep.subr.mxu0 0.0
    %162 = vmatpush1.msra.mxu0 0.0
    %163 = vmatprep.subr.mxu0 0.0
    %164 = vmatpush1.msra.mxu0 0.0
    %165 = vmatprep.subr.mxu0 0.0
    %166 = vmatpush1.msra.mxu0 0.0
    %167 = vmatprep.subr.mxu0 0.0
    %168 = vmatpush1.msra.mxu0 0.0
    %169 = vmatprep.subr.mxu0 0.0
    %170 = vmatpush1.msra.mxu0 0.0
    %171 = vmatprep.subr.mxu0 0.0
    %172 = vmatpush1.msra.mxu0 0.0
    %173 = vmatprep.subr.mxu0 0.0
    %174 = vmatpush1.msra.mxu0 0.0
    %175 = vmatprep.subr.mxu0 0.0
    %176 = vmatpush1.msra.mxu0 0.0
    %177 = vmatprep.subr.mxu0 0.0
    %178 = vmatpush1.msra.mxu0 0.0
    %179 = vmatprep.subr.mxu0 0.0
    %180 = vmatpush1.msra.mxu0 0.0
    %181 = vmatprep.subr.mxu0 0.0
    %182 = vmatpush1.msra.mxu0 0.0
    %183 = vmatprep.subr.mxu0 0.0
    %184 = vmatpush1.msra.mxu0 0.0
    %185 = vmatprep.subr.mxu0 0.0
    %186 = vmatpush1.msra.mxu0 0.0
    %187 = vmatprep.subr.mxu0 0.0
    %188 = vmatpush1.msra.mxu0 0.0
    %189 = vmatprep.subr.mxu0 0.0
    %190 = vmatpush1.msra.mxu0 0.0
    %191 = vmatprep.mubr.f32.mxu0 0.0
    %192 = vmatmul.mubr.f32.gmra.mrb[0].mxu0 %v125
    %v193 = vpop.f32.mrb[0].mxu0
    %v194 = vadd.f32 %v121, %v193
    %v195 = vpop.f32.mrb[0].mxu0
    %196 = vdwg.mxu0
    %197 = vst [vmem:[#allocation2] sm:$0xff] %v194
    // Predicated region
    $region22: #{tpu_custom_call.1} parent=1 // pred_check
      _
    $region23: #{tpu_custom_call.1} parent=1 // pred_check_branch
      %199 = sbr.rel (0) target = $region25
    $region24: #{tpu_custom_call.1} parent=1 // pred_region
      %s201 = ssub.s32 128, 128
      %202 = vsyncadd [#allocation3], %s201
      %s204 = sshll.u32 [#allocation2], 4
      %s205 = int_to_ptr.vmem [resolvable:$true] %s204
      %207 = dma.vmem_to_hbm [thread:$0]  %s205, 128, %s5, [#allocation3]
    $region25: #{tpu_custom_call.1} parent=1 // pred_fallthru
      _
    // Predicated region
    $region26: #{tpu_custom_call.1} parent=1 // pred_check
      _
    $region27: #{tpu_custom_call.1} parent=1 // pred_check_branch
      %209 = sbr.rel (0) target = $region29
    $region28: #{tpu_custom_call.1} parent=1 // pred_region
      %210 = dma.done [#allocation3], 128
    $region29: #{tpu_custom_call.1} parent=1 // pred_fallthru
      _
    %211 = vsyncpa [#allocation3], 1

</llo_original>
